<compile_context>
chip_gen: v7x
topology: tpu7x:2x2x1
jax: 0.10.0
libtpu: 0.0.40
codegen_flags: <defaults>
</compile_context>

<pallas_src>
import functools
import math

import jax
import jax.numpy as jnp
from jax import lax
from jax.experimental import pallas as pl
from jax.experimental.pallas import tpu as pltpu


def _encoder_kernel(x_ref, w_ref, bv_ref, o_ref, *, head_dims):
    """Fused PointDiffusionEncoder forward for one batch element.

    x_ref : (1, P, N)   input points, channel-major (already transposed)
    w_ref : (2S, P)     stacked [all-head qk weights ; all-head v weights]
    bv_ref: (S, 1)      stacked v-conv biases
    o_ref : (1, S, N)   concatenated head outputs (matches torch.cat(dim=1))
    """
    x = x_ref[0]                                  # (P, N)
    w = w_ref[...]                                # (2S, P)
    S = sum(head_dims)

    # Single fused 1x1-conv projection for q/k and v of every head (MXU).
    proj = jnp.dot(w, x, preferred_element_type=jnp.float32)      # (2S, N) f32
    q_all = proj[:S]                                              # (S, N)
    v_all = proj[S:] + bv_ref[...]                                # (S, N), bias bcast over N

    outs = []
    off = 0
    for L in head_dims:                           # static unrolled loop over heads
        q = q_all[off:off + L]                    # (L, N)
        v = v_all[off:off + L]                    # (L, N)

        # a[l1, l2] = sum_n q[l1, n] * q[l2, n]  (q/k share weights -> k == q).
        # Contract the shared N axis directly: no materialized transpose.
        a = lax.dot_general(q, q, (((1,), (1,)), ((), ())),
                            preferred_element_type=jnp.float32)   # (L, L)
        a = a * jnp.float32(1.0 / math.sqrt(L))

        # softmax over last dim (f32 throughout).
        a = a - jnp.max(a, axis=-1, keepdims=True)
        e = jnp.exp(a)
        inv = pl.reciprocal(jnp.sum(e, axis=-1, keepdims=True), approx=True)

        # out[l1, n] = softmax(a)[l1, :] @ v[:, n]; normalization deferred to a
        # cheap per-row scale after the matmul.
        out = jnp.dot(e, v, preferred_element_type=jnp.float32) * inv   # (L, N)
        outs.append(out)
        off += L

    o_ref[0] = jnp.concatenate(outs, axis=0).astype(o_ref.dtype)  # one dense store


def point_diffusion_encoder(x, params, *, matmul_dtype=None):
    """x: (B, N, point_dim); params: list of (wqk (L,P), wv (L,P), bv (L,)).

    Returns (B, sum(head_dims), N), matching the PyTorch module (the module
    feeds the identical x slice to every head and concatenates along dim=1).
    """
    B, N, P = x.shape
    head_dims = tuple(int(wqk.shape[0]) for (wqk, _, _) in params)
    S = sum(head_dims)

    # Stack all per-head conv weights into one projection matrix.
    wqk_all = jnp.concatenate([wqk for (wqk, _, _) in params], axis=0)   # (S, P)
    wv_all = jnp.concatenate([wv for (_, wv, _) in params], axis=0)      # (S, P)
    bv_all = jnp.concatenate([bv for (_, _, bv) in params], axis=0)      # (S,)
    w_all = jnp.concatenate([wqk_all, wv_all], axis=0)                   # (2S, P)
    bv_all = bv_all.reshape(S, 1).astype(jnp.float32)

    # Channel-major layout + lane-dense N (pad to a multiple of 128 lanes).
    x_pn = jnp.transpose(x, (0, 2, 1))                                   # (B, P, N)
    n_pad = pl.cdiv(N, 128) * 128
    if n_pad != N:
        # Zero columns project to zero q -> contribute nothing to q @ q^T.
        x_pn = jnp.pad(x_pn, ((0, 0), (0, 0), (0, n_pad - N)))

    if matmul_dtype is not None:       # e.g. jnp.bfloat16 on v6e/v7x
        x_pn = x_pn.astype(matmul_dtype)
        w_all = w_all.astype(matmul_dtype)

    kernel = functools.partial(_encoder_kernel, head_dims=head_dims)
    out = pl.pallas_call(
        kernel,
        out_shape=jax.ShapeDtypeStruct((B, S, n_pad), x.dtype),
        grid_spec=pltpu.PrefetchScalarGridSpec(
            num_scalar_prefetch=0,
            grid=(B,),
            in_specs=[
                pl.BlockSpec((1, P, n_pad), lambda b: (b, 0, 0)),
                pl.BlockSpec((2 * S, P), lambda b: (0, 0)),
                pl.BlockSpec((S, 1), lambda b: (0, 0)),
            ],
            out_specs=pl.BlockSpec((1, S, n_pad), lambda b: (b, 0, 0)),
        ),
        compiler_params=pltpu.CompilerParams(dimension_semantics=("parallel",)),
    )(x_pn, w_all, bv_all)

    if n_pad != N:
        out = out[:, :, :N]
    return out


def _reference(x, params):
    """Pure-JAX reference mirroring the PyTorch math, for validation."""
    outs = []
    for wqk, wv, bv in params:
        xc = jnp.transpose(x, (0, 2, 1))                               # (B, P, N)
        q = jnp.einsum("lp,bpn->bln", wqk, xc)                         # (B, L, N)
        k = q
        v = jnp.einsum("lp,bpn->bln", wv, xc) + bv[None, :, None]      # (B, L, N)
        a = jnp.einsum("bln,bmn->blm", q, k) / math.sqrt(q.shape[1])   # (B, L, L)
        p = jax.nn.softmax(a, axis=-1)
        outs.append(jnp.einsum("blm,bmn->bln", p, v))                  # (B, L, N)
    return jnp.concatenate(outs, axis=1)


def make_params(key, point_dim, head_dims):
    params = []
    for L in head_dims:
        k1, k2, k3, key = jax.random.split(key, 4)
        bound = 1.0 / math.sqrt(point_dim)  # Conv1d-style init, deterministic
        wqk = jax.random.uniform(k1, (L, point_dim), jnp.float32, -bound, bound)
        wv = jax.random.uniform(k2, (L, point_dim), jnp.float32, -bound, bound)
        bv = jax.random.uniform(k3, (L,), jnp.float32, -bound, bound)
        params.append((wqk, wv, bv))
    return params


if __name__ == "__main__":
    key = jax.random.PRNGKey(0)
    kx, kp = jax.random.split(key)

    B, N, point_dim = 2, 16, 4
    head_dims = [8, 16]

    x = jax.random.normal(kx, (B, N, point_dim), jnp.float32)
    params = make_params(kp, point_dim, head_dims)

    enc = jax.jit(point_diffusion_encoder)
    out = jax.block_until_ready(enc(x, params))

    ref = jax.block_until_ready(_reference(x, params))
    assert out.shape == (B, sum(head_dims), N), out.shape
    # Tolerance covers the EUP approximate-reciprocal softmax denominator;
    # everything else is exact f32.
    assert jnp.allclose(out, ref, atol=1e-2, rtol=1e-2), "mismatch vs reference"

    print("KERNEL_OK")
</pallas_src>

<mosaic_0001>
module attributes {stable_mosaic.version = 11 : i64} {
  func.func @_encoder_kernel(%arg0: i32, %arg1: memref<1x4x128xf32, #tpu.memory_space<vmem>>, %arg2: memref<48x4xf32, #tpu.memory_space<vmem>>, %arg3: memref<24x1xf32, #tpu.memory_space<vmem>>, %arg4: memref<1x24x128xf32, #tpu.memory_space<vmem>>) attributes {dimension_semantics = [#tpu.dimension_semantics<parallel>], iteration_bounds = array<i64: 2>, scalar_prefetch = 0 : i64, scratch_operands = 0 : i64, tpu.core_type = #tpu.core_type<tc>, window_params = [{transform_indices = @transform_0, window_bounds = array<i64: 1, 4, 128>}, {pipeline_mode = #tpu.pipeline_mode<synchronous>, transform_indices = @transform_1, window_bounds = array<i64: 48, 4>}, {pipeline_mode = #tpu.pipeline_mode<synchronous>, transform_indices = @transform_2, window_bounds = array<i64: 24, 1>}, {transform_indices = @transform_3, window_bounds = array<i64: 1, 24, 128>}]} {
    %c0 = arith.constant 0 : index
    %c0_0 = arith.constant 0 : index
    %c0_1 = arith.constant 0 : index
    %0 = vector.load %arg1[%c0, %c0_0, %c0_1] : memref<1x4x128xf32, #tpu.memory_space<vmem>>, vector<1x4x128xf32>
    %1 = vector.shape_cast %0 : vector<1x4x128xf32> to vector<4x128xf32>
    %c0_2 = arith.constant 0 : index
    %c0_3 = arith.constant 0 : index
    %2 = vector.load %arg2[%c0_2, %c0_3] : memref<48x4xf32, #tpu.memory_space<vmem>>, vector<48x4xf32>
    %cst = arith.constant dense<0.000000e+00> : vector<48x128xf32>
    %3 = tpu.matmul %2, %1, %cst {dimension_numbers = #tpu.dot_dimension_numbers<[1], [0], [0], [1], [0, 0, 1, 1], [], []>} : vector<48x4xf32>, vector<4x128xf32>, vector<48x128xf32> -> vector<48x128xf32>
    %4 = vector.extract_strided_slice %3 {offsets = [0, 0], sizes = [24, 128], strides = [1, 1]} : vector<48x128xf32> to vector<24x128xf32>
    %5 = vector.extract_strided_slice %3 {offsets = [24, 0], sizes = [24, 128], strides = [1, 1]} : vector<48x128xf32> to vector<24x128xf32>
    %c0_4 = arith.constant 0 : index
    %c0_5 = arith.constant 0 : index
    %6 = vector.load %arg3[%c0_4, %c0_5] : memref<24x1xf32, #tpu.memory_space<vmem>>, vector<24x1xf32>
    %7 = vector.broadcast %6 : vector<24x1xf32> to vector<24x128xf32>
    %8 = arith.addf %5, %7 : vector<24x128xf32>
    %9 = vector.extract_strided_slice %4 {offsets = [0, 0], sizes = [8, 128], strides = [1, 1]} : vector<24x128xf32> to vector<8x128xf32>
    %10 = vector.extract_strided_slice %8 {offsets = [0, 0], sizes = [8, 128], strides = [1, 1]} : vector<24x128xf32> to vector<8x128xf32>
    %cst_6 = arith.constant dense<0.000000e+00> : vector<8x8xf32>
    %11 = tpu.matmul %9, %9, %cst_6 {dimension_numbers = #tpu.dot_dimension_numbers<[1], [1], [0], [0], [0, 0, 1, 0], [], []>} : vector<8x128xf32>, vector<8x128xf32>, vector<8x8xf32> -> vector<8x8xf32>
    %cst_7 = arith.constant 0.353553385 : f32
    %12 = vector.broadcast %cst_7 : f32 to vector<8x8xf32>
    %13 = arith.mulf %11, %12 : vector<8x8xf32>
    %cst_8 = arith.constant dense<0xFF800000> : vector<8xf32>
    %14 = vector.multi_reduction <maximumf>, %13, %cst_8 [1] : vector<8x8xf32> to vector<8xf32>
    %15 = vector.shape_cast %14 : vector<8xf32> to vector<8x1xf32>
    %16 = vector.broadcast %15 : vector<8x1xf32> to vector<8x8xf32>
    %17 = arith.subf %13, %16 : vector<8x8xf32>
    %18 = math.exp %17 : vector<8x8xf32>
    %cst_9 = arith.constant dense<0.000000e+00> : vector<8xf32>
    %19 = vector.multi_reduction <add>, %18, %cst_9 [1] : vector<8x8xf32> to vector<8xf32>
    %20 = vector.shape_cast %19 : vector<8xf32> to vector<8x1xf32>
    %21 = tpu.reciprocal %20 {approx = true} : vector<8x1xf32> -> vector<8x1xf32>
    %cst_10 = arith.constant dense<0.000000e+00> : vector<8x128xf32>
    %22 = tpu.matmul %18, %10, %cst_10 {dimension_numbers = #tpu.dot_dimension_numbers<[1], [0], [0], [1], [0, 0, 1, 1], [], []>} : vector<8x8xf32>, vector<8x128xf32>, vector<8x128xf32> -> vector<8x128xf32>
    %23 = vector.broadcast %21 : vector<8x1xf32> to vector<8x128xf32>
    %24 = arith.mulf %22, %23 : vector<8x128xf32>
    %25 = vector.extract_strided_slice %4 {offsets = [8, 0], sizes = [16, 128], strides = [1, 1]} : vector<24x128xf32> to vector<16x128xf32>
    %26 = vector.extract_strided_slice %8 {offsets = [8, 0], sizes = [16, 128], strides = [1, 1]} : vector<24x128xf32> to vector<16x128xf32>
    %cst_11 = arith.constant dense<0.000000e+00> : vector<16x16xf32>
    %27 = tpu.matmul %25, %25, %cst_11 {dimension_numbers = #tpu.dot_dimension_numbers<[1], [1], [0], [0], [0, 0, 1, 0], [], []>} : vector<16x128xf32>, vector<16x128xf32>, vector<16x16xf32> -> vector<16x16xf32>
    %cst_12 = arith.constant 2.500000e-01 : f32
    %28 = vector.broadcast %cst_12 : f32 to vector<16x16xf32>
    %29 = arith.mulf %27, %28 : vector<16x16xf32>
    %cst_13 = arith.constant dense<0xFF800000> : vector<16xf32>
    %30 = vector.multi_reduction <maximumf>, %29, %cst_13 [1] : vector<16x16xf32> to vector<16xf32>
    %31 = vector.shape_cast %30 : vector<16xf32> to vector<16x1xf32>
    %32 = vector.broadcast %31 : vector<16x1xf32> to vector<16x16xf32>
    %33 = arith.subf %29, %32 : vector<16x16xf32>
    %34 = math.exp %33 : vector<16x16xf32>
    %cst_14 = arith.constant dense<0.000000e+00> : vector<16xf32>
    %35 = vector.multi_reduction <add>, %34, %cst_14 [1] : vector<16x16xf32> to vector<16xf32>
    %36 = vector.shape_cast %35 : vector<16xf32> to vector<16x1xf32>
    %37 = tpu.reciprocal %36 {approx = true} : vector<16x1xf32> -> vector<16x1xf32>
    %cst_15 = arith.constant dense<0.000000e+00> : vector<16x128xf32>
    %38 = tpu.matmul %34, %26, %cst_15 {dimension_numbers = #tpu.dot_dimension_numbers<[1], [0], [0], [1], [0, 0, 1, 1], [], []>} : vector<16x16xf32>, vector<16x128xf32>, vector<16x128xf32> -> vector<16x128xf32>
    %39 = vector.broadcast %37 : vector<16x1xf32> to vector<16x128xf32>
    %40 = arith.mulf %38, %39 : vector<16x128xf32>
    %41 = tpu.concatenate %24, %40 in 0 : vector<8x128xf32>, vector<16x128xf32> -> vector<24x128xf32>
    %c0_16 = arith.constant 0 : index
    %c0_17 = arith.constant 0 : index
    %c0_18 = arith.constant 0 : index
    %42 = vector.load %arg4[%c0_16, %c0_17, %c0_18] : memref<1x24x128xf32, #tpu.memory_space<vmem>>, vector<1x24x128xf32>
    %43 = vector.shape_cast %42 : vector<1x24x128xf32> to vector<24x128xf32>
    %44 = vector.shape_cast %41 : vector<24x128xf32> to vector<1x24x128xf32>
    tpu.vector_store %arg4[%c0_16, %c0_17, %c0_18], %44 {strides = array<i32>} : memref<1x24x128xf32, #tpu.memory_space<vmem>>, vector<1x24x128xf32>,
    return
  }
  func.func @transform_0(%arg0: i32) -> (i32, i32, i32) {
    %c0_i32 = arith.constant 0 : i32
    %c0_i32_0 = arith.constant 0 : i32
    %c0_i32_1 = arith.constant 0 : i32
    return %arg0, %c0_i32, %c0_i32_0 : i32, i32, i32
  }
  func.func @transform_1(%arg0: i32) -> (i32, i32) {
    %c0_i32 = arith.constant 0 : i32
    %c0_i32_0 = arith.constant 0 : i32
    %c0_i32_1 = arith.constant 0 : i32
    return %c0_i32, %c0_i32_0 : i32, i32
  }
  func.func @transform_2(%arg0: i32) -> (i32, i32) {
    %c0_i32 = arith.constant 0 : i32
    %c0_i32_0 = arith.constant 0 : i32
    %c0_i32_1 = arith.constant 0 : i32
    return %c0_i32, %c0_i32_0 : i32, i32
  }
  func.func @transform_3(%arg0: i32) -> (i32, i32, i32) {
    %c0_i32 = arith.constant 0 : i32
    %c0_i32_0 = arith.constant 0 : i32
    %c0_i32_1 = arith.constant 0 : i32
    return %arg0, %c0_i32, %c0_i32_0 : i32, i32, i32
  }
}

</mosaic_0001>

<llo_original>
// kernel: point_diffusion_encoder.1
$region0: #{point_diffusion_encoder.1}
  #allocation0 [shape = 'u32[]', space=smem, size = 0x4, offset = 0x4, fixed_abs, tag = 'smem constant byte address 0x4 - core index']
  #allocation1 [shape = 'u32[144,128]{1,0:T(1,128)}', space=vmem, size = 0x12000, scoped, tag = 'internal scratch']
  %s0 = inlined_call_operand.vmem [shape: f32[2,4,128], index: 0, kind: input, shape index: {}]
  %s1 = inlined_call_operand.vmem [shape: f32[48,4], index: 1, kind: input, shape index: {}]
  %s2 = inlined_call_operand.vmem [shape: f32[24,1], index: 2, kind: input, shape index: {}]
  %s3 = inlined_call_operand.vmem [shape: f32[2,24,128], index: 3, kind: output, shape index: {}]
  %s4 = sld [smem:[#allocation0]]
  $region45: #{point_diffusion_encoder.1} parent=0
    _
  %s6 = ssub.s32 1, %s4
  %s7 = scalar_select 0, %s6, %s4
  loop: start=0, step=1, limit=4
  $region2: #{point_diffusion_encoder.1} parent=0 // loop_pre_header
    _
  $region3: #{point_diffusion_encoder.1} parent=0 // loop_header
    %s9 = sphi 0, %s13
    %p10 = scmp.ge.s32.totalorder %s9, 4
    %s19 = sphi 0, %s21
    %s22 = sphi 0, %s19
    %s23 = sphi 0, %s22
    %s39 = sphi 0, %s23
    %s43 = sphi 0, %s43
    %s45 = sphi 0, %s43
    %s46 = sphi 0, %s45
    %s60 = sphi 0, %s46
    %s64 = sphi 0, %s64
    %s66 = sphi 0, %s64
    %s67 = sphi 0, %s66
    %s81 = sphi 0, %s67
    %s87 = sphi 0, %s89
    %s90 = sphi 0, %s87
    %s91 = sphi 0, %s90
    %s107 = sphi 0, %s91
  $region4: #{point_diffusion_encoder.1} parent=0 // loop_header_branch
    %12 = sbr.rel (%p10) target = $region8
  $region5: #{point_diffusion_encoder.1} parent=0 // loop_body
    %s14 = ssub.s32 %s9, 1
    %s15 = ssub.s32 %s9, 2
    %s16 = sadd.s32 %s9, 1
    %s17 = ssub.s32 %s9, %s16
    %p18 = scmp.eq.s32.totalorder %s17, 0
    %s20 = sadd.s32 %s19, 1
    %s21 = scalar_select %p18, %s19, %s20
    %p24 = pneg %p18
    %p25 = scmp.eq.s32.totalorder %s9, 1
    %p26 = por %p24, %p25
    %p27 = scmp.ne.s32.totalorder %s19, %s22
    %p28 = scmp.eq.s32.totalorder %s9, 0
    %p29 = por %p27, %p28
    %p30 = scmp.ne.s32.totalorder %s19, %s22
    %p31 = scmp.eq.s32.totalorder %s14, 1
    %p32 = por %p30, %p31
    %p33 = scmp.ne.s32.totalorder %s22, %s23
    %p34 = scmp.eq.s32.totalorder %s14, 0
    %p35 = por %p33, %p34
    %p36 = scmp.ne.s32.totalorder %s22, %s23
    %p37 = scmp.eq.s32.totalorder %s15, 1
    %p38 = por %p36, %p37
    %p40 = scmp.ne.s32.totalorder %s23, %s39
    %p41 = scmp.eq.s32.totalorder %s15, 0
    %p42 = por %p40, %p41
    %s44 = sadd.s32 %s43, 1
    %p47 = scmp.eq.s32.totalorder %s9, 1
    %p48 = scmp.ne.s32.totalorder %s43, %s45
    %p49 = scmp.eq.s32.totalorder %s9, 0
    %p50 = por %p48, %p49
    %p51 = scmp.ne.s32.totalorder %s43, %s45
    %p52 = scmp.eq.s32.totalorder %s14, 1
    %p53 = por %p51, %p52
    %p54 = scmp.ne.s32.totalorder %s45, %s46
    %p55 = scmp.eq.s32.totalorder %s14, 0
    %p56 = por %p54, %p55
    %p57 = scmp.ne.s32.totalorder %s45, %s46
    %p58 = scmp.eq.s32.totalorder %s15, 1
    %p59 = por %p57, %p58
    %p61 = scmp.ne.s32.totalorder %s46, %s60
    %p62 = scmp.eq.s32.totalorder %s15, 0
    %p63 = por %p61, %p62
    %s65 = sadd.s32 %s64, 1
    %p68 = scmp.eq.s32.totalorder %s9, 1
    %p69 = scmp.ne.s32.totalorder %s64, %s66
    %p70 = scmp.eq.s32.totalorder %s9, 0
    %p71 = por %p69, %p70
    %p72 = scmp.ne.s32.totalorder %s64, %s66
    %p73 = scmp.eq.s32.totalorder %s14, 1
    %p74 = por %p72, %p73
    %p75 = scmp.ne.s32.totalorder %s66, %s67
    %p76 = scmp.eq.s32.totalorder %s14, 0
    %p77 = por %p75, %p76
    %p78 = scmp.ne.s32.totalorder %s66, %s67
    %p79 = scmp.eq.s32.totalorder %s15, 1
    %p80 = por %p78, %p79
    %p82 = scmp.ne.s32.totalorder %s67, %s81
    %p83 = scmp.eq.s32.totalorder %s15, 0
    %p84 = por %p82, %p83
    %s85 = ssub.s32 %s9, %s16
    %p86 = scmp.eq.s32.totalorder %s85, 0
    %s88 = sadd.s32 %s87, 1
    %s89 = scalar_select %p86, %s87, %s88
    %p92 = pneg %p86
    %p93 = scmp.eq.s32.totalorder %s9, 1
    %p94 = por %p92, %p93
    %p95 = scmp.ne.s32.totalorder %s87, %s90
    %p96 = scmp.eq.s32.totalorder %s9, 0
    %p97 = por %p95, %p96
    %p98 = scmp.ne.s32.totalorder %s87, %s90
    %p99 = scmp.eq.s32.totalorder %s14, 1
    %p100 = por %p98, %p99
    %p101 = scmp.ne.s32.totalorder %s90, %s91
    %p102 = scmp.eq.s32.totalorder %s14, 0
    %p103 = por %p101, %p102
    %p104 = scmp.ne.s32.totalorder %s90, %s91
    %p105 = scmp.eq.s32.totalorder %s15, 1
    %p106 = por %p104, %p105
    %p108 = scmp.ne.s32.totalorder %s91, %s107
    %p109 = scmp.eq.s32.totalorder %s15, 0
    %p110 = por %p108, %p109
    %p111 = scmp.le.s32.totalorder 1, %s9
    %p112 = scmp.lt.s32.totalorder %s9, 3
    %p113 = pnand %p111, %p112
    %p114 = pneg %p113
    // Predicated region
    $region9: #{point_diffusion_encoder.1} parent=5 // pred_check
      _
    $region10: #{point_diffusion_encoder.1} parent=5 // pred_check_branch
      %116 = sbr.rel (%p113) target = $region12
    $region11: #{point_diffusion_encoder.1} parent=5 // pred_region
      %s117 = ssub.s32 %s9, 1
      // Predicated region
      $region13: #{point_diffusion_encoder.1} parent=11 // pred_check
        %p118 = pneg %p56
      $region14: #{point_diffusion_encoder.1} parent=11 // pred_check_branch
        %120 = sbr.rel (%p118) target = $region16
      $region15: #{point_diffusion_encoder.1} parent=11 // pred_region
        _
      $region16: #{point_diffusion_encoder.1} parent=11 // pred_fallthru
        _
      // Predicated region
      $region17: #{point_diffusion_encoder.1} parent=11 // pred_check
        %p121 = pneg %p77
      $region18: #{point_diffusion_encoder.1} parent=11 // pred_check_branch
        %123 = sbr.rel (%p121) target = $region20
      $region19: #{point_diffusion_encoder.1} parent=11 // pred_region
        _
      $region20: #{point_diffusion_encoder.1} parent=11 // pred_fallthru
        _
    $region12: #{point_diffusion_encoder.1} parent=5 // pred_fallthru
      _
    %p124 = scmp.lt.s32.totalorder %s9, 2
    // Predicated region
    $region21: #{point_diffusion_encoder.1} parent=5 // pred_check
      %p125 = pneg %p124
    $region22: #{point_diffusion_encoder.1} parent=5 // pred_check_branch
      %127 = sbr.rel (%p125) target = $region24
    $region23: #{point_diffusion_encoder.1} parent=5 // pred_region
      // Predicated region
      $region25: #{point_diffusion_encoder.1} parent=23 // pred_check
        %p128 = pneg %p29
      $region26: #{point_diffusion_encoder.1} parent=23 // pred_check_branch
        %130 = sbr.rel (%p128) target = $region28
      $region27: #{point_diffusion_encoder.1} parent=23 // pred_region
        %p131 = scmp.lt.s32.totalorder %s9, 1
        %s132 = scalar_select %p131, %s9, 1
        %s133 = smul.addr %s132, 4
        %s134 = scalar_lea.vmem %s0, %s133
      $region28: #{point_diffusion_encoder.1} parent=23 // pred_fallthru
        _
    $region24: #{point_diffusion_encoder.1} parent=5 // pred_fallthru
      _
    %p135 = scmp.le.s32.totalorder 1, %s9
    %p136 = scmp.lt.s32.totalorder %s9, 3
    %p137 = pnand %p135, %p136
    %p138 = pneg %p137
    // Predicated region
    $region29: #{point_diffusion_encoder.1} parent=5 // pred_check
      _
    $region30: #{point_diffusion_encoder.1} parent=5 // pred_check_branch
      %140 = sbr.rel (%p137) target = $region32
    $region31: #{point_diffusion_encoder.1} parent=5 // pred_region
      %s141 = ssub.s32 %s9, 1
      %p142 = scmp.lt.s32.totalorder %s14, 1
      %s143 = scalar_select %p142, %s14, 1
      %s144 = smul.addr %s143, 4
      %s145 = scalar_lea.vmem %s0, %s144
      %p146 = pneg %p35
      %p147 = pneg %p32
      %p148 = pneg %p56
      %p149 = pneg %p53
      %p150 = pneg %p77
      %p151 = pneg %p74
      %p152 = pneg %p103
      %p153 = pneg %p100
      %p154 = scmp.lt.s32.totalorder %s14, 1
      %s155 = scalar_select %p154, %s14, 1
      %s156 = smul.addr %s155, 3
      %s157 = smul.addr %s156, 8
      %s158 = scalar_lea.vmem %s3, %s157
      %p159 = scmp.lt.s32.totalorder %s14, 1
      %s160 = scalar_select %p159, %s14, 1
      %s161 = smul.addr %s160, 4
      %s162 = scalar_lea.vmem %s0, %s161
      %p163 = scmp.lt.s32.totalorder %s14, 1
      %s164 = scalar_select %p163, %s14, 1
      %s165 = smul.addr %s164, 3
      %s166 = smul.addr %s165, 8
      %s167 = scalar_lea.vmem %s3, %s166
      %v168 = vld [vmem:[%s162] sm:$0xf]
      %v169 = vld [vmem:[%s1] sm:$0xff]
      %v170 = vld [vmem:[%s1 + $0x8] sm:$0xff]
      %v171 = vld [vmem:[%s1 + $0x10] sm:$0xff]
      %v172 = vld [vmem:[%s1 + $0x18] sm:$0xff]
      %v173 = vld [vmem:[%s1 + $0x20] sm:$0xff]
      %v174 = vld [vmem:[%s1 + $0x28] sm:$0xff]
      %vm175 = vcmask 31744
      %v177 = vsel %vm175, %v169, 0
      %v180 = vsel %vm175, %v170, 0
      %v183 = vsel %vm175, %v171, 0
      %v186 = vsel %vm175, %v172, 0
      %v189 = vsel %vm175, %v173, 0
      %v192 = vsel %vm175, %v174, 0
      %vm194 = vcmask 1043456
      %v196 = vsel %vm194, %v168, 0
      %198 = vmatprep.subr.mxu0 0.0
      %199 = vmatpush1.msra.mxu0 %v196
      %200 = vmatprep.subr.mxu0 0.0
      %201 = vmatpush1.msra.mxu0 0.0
      %202 = vmatprep.subr.mxu0 0.0
      %203 = vmatpush1.msra.mxu0 0.0
      %204 = vmatprep.subr.mxu0 0.0
      %205 = vmatpush1.msra.mxu0 0.0
      %206 = vmatprep.subr.mxu0 0.0
      %207 = vmatpush1.msra.mxu0 0.0
      %208 = vmatprep.subr.mxu0 0.0
      %209 = vmatpush1.msra.mxu0 0.0
      %210 = vmatprep.subr.mxu0 0.0
      %211 = vmatpush1.msra.mxu0 0.0
      %212 = vmatprep.subr.mxu0 0.0
      %213 = vmatpush1.msra.mxu0 0.0
      %214 = vmatprep.subr.mxu0 0.0
      %215 = vmatpush1.msra.mxu0 0.0
      %216 = vmatprep.subr.mxu0 0.0
      %217 = vmatpush1.msra.mxu0 0.0
      %218 = vmatprep.subr.mxu0 0.0
      %219 = vmatpush1.msra.mxu0 0.0
      %220 = vmatprep.subr.mxu0 0.0
      %221 = vmatpush1.msra.mxu0 0.0
      %222 = vmatprep.subr.mxu0 0.0
      %223 = vmatpush1.msra.mxu0 0.0
      %224 = vmatprep.subr.mxu0 0.0
      %225 = vmatpush1.msra.mxu0 0.0
      %226 = vmatprep.subr.mxu0 0.0
      %227 = vmatpush1.msra.mxu0 0.0
      %228 = vmatprep.subr.mxu0 0.0
      %229 = vmatpush1.msra.mxu0 0.0
      %230 = vmatprep.subr.mxu0 0.0
      %231 = vmatpush1.msra.mxu0 0.0
      %232 = vmatprep.subr.mxu0 0.0
      %233 = vmatpush1.msra.mxu0 0.0
      %234 = vmatprep.subr.mxu0 0.0
      %235 = vmatpush1.msra.mxu0 0.0
      %236 = vmatprep.subr.mxu0 0.0
      %237 = vmatpush1.msra.mxu0 0.0
      %238 = vmatprep.subr.mxu0 0.0
      %239 = vmatpush1.msra.mxu0 0.0
      %240 = vmatprep.subr.mxu0 0.0
      %241 = vmatpush1.msra.mxu0 0.0
      %242 = vmatprep.subr.mxu0 0.0
      %243 = vmatpush1.msra.mxu0 0.0
      %244 = vmatprep.subr.mxu0 0.0
      %245 = vmatpush1.msra.mxu0 0.0
      %246 = vmatprep.subr.mxu0 0.0
      %247 = vmatpush1.msra.mxu0 0.0
      %248 = vmatprep.subr.mxu0 0.0
      %249 = vmatpush1.msra.mxu0 0.0
      %250 = vmatprep.subr.mxu0 0.0
      %251 = vmatpush1.msra.mxu0 0.0
      %252 = vmatprep.subr.mxu0 0.0
      %253 = vmatpush1.msra.mxu0 0.0
      %254 = vmatprep.subr.mxu0 0.0
      %255 = vmatpush1.msra.mxu0 0.0
      %256 = vmatprep.subr.mxu0 0.0
      %257 = vmatpush1.msra.mxu0 0.0
      %258 = vmatprep.subr.mxu0 0.0
      %259 = vmatpush1.msra.mxu0 0.0
      %260 = vmatprep.subr.mxu0 0.0
      %261 = vmatpush1.msra.mxu0 0.0
      %262 = vmatprep.mubr.f32.mxu0 0.0
      %263 = vmatmul.mubr.f32.gmra.mrb[0].mxu0 %v177
      %v264 = vpop.f32.mrb[0].mxu0
      %v265 = vadd.f32 0.0, %v264
      %v266 = vpop.f32.mrb[0].mxu0
      %267 = vmatprep.mubr.f32.mxu0 0.0
      %268 = vmatmul.mubr.f32.gmra.mrb[0].mxu0 %v180
      %v269 = vpop.f32.mrb[0].mxu0
      %v270 = vadd.f32 0.0, %v269
      %v271 = vpop.f32.mrb[0].mxu0
      %272 = vmatprep.mubr.f32.mxu0 0.0
      %273 = vmatmul.mubr.f32.gmra.mrb[0].mxu0 %v183
      %v274 = vpop.f32.mrb[0].mxu0
      %v275 = vadd.f32 0.0, %v274
      %v276 = vpop.f32.mrb[0].mxu0
      %277 = vmatprep.mubr.f32.mxu0 0.0
      %278 = vmatmul.mubr.f32.gmra.mrb[0].mxu0 %v186
      %v279 = vpop.f32.mrb[0].mxu0
      %v280 = vadd.f32 0.0, %v279
      %v281 = vpop.f32.mrb[0].mxu0
      %282 = vmatprep.mubr.f32.mxu0 0.0
      %283 = vmatmul.mubr.f32.gmra.mrb[0].mxu0 %v189
      %v284 = vpop.f32.mrb[0].mxu0
      %v285 = vadd.f32 0.0, %v284
      %v286 = vpop.f32.mrb[0].mxu0
      %287 = vmatprep.mubr.f32.mxu0 0.0
      %288 = vmatmul.mubr.f32.gmra.mrb[0].mxu0 %v192
      %v289 = vpop.f32.mrb[0].mxu0
      %v290 = vadd.f32 0.0, %v289
      %v291 = vpop.f32.mrb[0].mxu0
      %292 = vdwg.mxu0
      %v293 = vld [vmem:[%s2] sm:$0xff]
      %v294 = vld [vmem:[%s2 + $0x8] sm:$0xff]
      %v295 = vld [vmem:[%s2 + $0x10] sm:$0xff]
      %297 = vset.pattern.permute.xlu0 0
      %298 = vperm.xlu0 %297, %v293
      %v299 = vpop.permute.xlu0 %298
      %302 = vset.pattern.permute.xlu0 0
      %303 = vperm.xlu0 %302, %v294
      %v304 = vpop.permute.xlu0 %303
      %307 = vset.pattern.permute.xlu0 0
      %308 = vperm.xlu0 %307, %v295
      %v309 = vpop.permute.xlu0 %308
      %v311 = vadd.f32 %v280, %v299
      %v312 = vadd.f32 %v285, %v304
      %v313 = vadd.f32 %v290, %v309
      %314 = vmatprep.subr.mxu0 0.0
      %315 = vmatpush1.xpose.msra.mxu0 %v265
      %316 = vmatprep.subr.mxu0 0.0
      %317 = vmatpush1.xpose.msra.mxu0 0.0
      %318 = vmatprep.subr.mxu0 0.0
      %319 = vmatpush1.xpose.msra.mxu0 0.0
      %320 = vmatprep.subr.mxu0 0.0
      %321 = vmatpush1.xpose.msra.mxu0 0.0
      %322 = vmatprep.subr.mxu0 0.0
      %323 = vmatpush1.xpose.msra.mxu0 0.0
      %324 = vmatprep.subr.mxu0 0.0
      %325 = vmatpush1.xpose.msra.mxu0 0.0
      %326 = vmatprep.subr.mxu0 0.0
      %327 = vmatpush1.xpose.msra.mxu0 0.0
      %328 = vmatprep.subr.mxu0 0.0
      %329 = vmatpush1.xpose.msra.mxu0 0.0
      %330 = vmatprep.subr.mxu0 0.0
      %331 = vmatpush1.xpose.msra.mxu0 0.0
      %332 = vmatprep.subr.mxu0 0.0
      %333 = vmatpush1.xpose.msra.mxu0 0.0
      %334 = vmatprep.subr.mxu0 0.0
      %335 = vmatpush1.xpose.msra.mxu0 0.0
      %336 = vmatprep.subr.mxu0 0.0
      %337 = vmatpush1.xpose.msra.mxu0 0.0
      %338 = vmatprep.subr.mxu0 0.0
      %339 = vmatpush1.xpose.msra.mxu0 0.0
      %340 = vmatprep.subr.mxu0 0.0
      %341 = vmatpush1.xpose.msra.mxu0 0.0
      %342 = vmatprep.subr.mxu0 0.0
      %343 = vmatpush1.xpose.msra.mxu0 0.0
      %344 = vmatprep.subr.mxu0 0.0
      %345 = vmatpush1.xpose.msra.mxu0 0.0
      %346 = vmatprep.subr.mxu0 0.0
      %347 = vmatpush1.xpose.msra.mxu0 0.0
      %348 = vmatprep.subr.mxu0 0.0
      %349 = vmatpush1.xpose.msra.mxu0 0.0
      %350 = vmatprep.subr.mxu0 0.0
      %351 = vmatpush1.xpose.msra.mxu0 0.0
      %352 = vmatprep.subr.mxu0 0.0
      %353 = vmatpush1.xpose.msra.mxu0 0.0
      %354 = vmatprep.subr.mxu0 0.0
      %355 = vmatpush1.xpose.msra.mxu0 0.0
      %356 = vmatprep.subr.mxu0 0.0
      %357 = vmatpush1.xpose.msra.mxu0 0.0
      %358 = vmatprep.subr.mxu0 0.0
      %359 = vmatpush1.xpose.msra.mxu0 0.0
      %360 = vmatprep.subr.mxu0 0.0
      %361 = vmatpush1.xpose.msra.mxu0 0.0
      %362 = vmatprep.subr.mxu0 0.0
      %363 = vmatpush1.xpose.msra.mxu0 0.0
      %364 = vmatprep.subr.mxu0 0.0
      %365 = vmatpush1.xpose.msra.mxu0 0.0
      %366 = vmatprep.subr.mxu0 0.0
      %367 = vmatpush1.xpose.msra.mxu0 0.0
      %368 = vmatprep.subr.mxu0 0.0
      %369 = vmatpush1.xpose.msra.mxu0 0.0
      %370 = vmatprep.subr.mxu0 0.0
      %371 = vmatpush1.xpose.msra.mxu0 0.0
      %372 = vmatprep.subr.mxu0 0.0
      %373 = vmatpush1.xpose.msra.mxu0 0.0
      %374 = vmatprep.subr.mxu0 0.0
      %375 = vmatpush1.xpose.msra.mxu0 0.0
      %376 = vmatprep.subr.mxu0 0.0
      %377 = vmatpush1.xpose.msra.mxu0 0.0
      %378 = vmatprep.mubr.f32.mxu0 0.0
      %379 = vmatmul.mubr.f32.gmra.mrb[0].mxu0 %v265
      %v380 = vpop.f32.mrb[0].mxu0
      %v381 = vadd.f32 0.0, %v380
      %v382 = vpop.f32.mrb[0].mxu0
      %383 = vdwg.mxu0
      %v384 = vmul.f32 %v381, 0.35355338
      %vm385 = vcmask 64512
      %v386 = vsel %vm385, %v384, -inf
      %387 = vmax.xlane.f32.xlu0 %v386
      %v388 = vpop.xlane.xlu0 %387
      %v389 = vsub.f32 %v384, %v388
      %v390 = vmul.f32 %v389, 1.442695
      %v391 = vpow.pop %v390
      %v392 = vsel %vm385, %v391, 0.0
      %393 = vadd.xlane.f32.xlu0 %v392
      %v394 = vpop.xlane.xlu0 %393
      %v395 = vrcp.pop %v394
      %v397 = vsel %vm385, %v391, 0
      %399 = vmatprep.subr.mxu0 0.0
      %400 = vmatpush1.msra.mxu0 %v311
      %401 = vmatprep.subr.mxu0 0.0
      %402 = vmatpush1.msra.mxu0 0.0
      %403 = vmatprep.subr.mxu0 0.0
      %404 = vmatpush1.msra.mxu0 0.0
      %405 = vmatprep.subr.mxu0 0.0
      %406 = vmatpush1.msra.mxu0 0.0
      %407 = vmatprep.subr.mxu0 0.0
      %408 = vmatpush1.msra.mxu0 0.0
      %409 = vmatprep.subr.mxu0 0.0
      %410 = vmatpush1.msra.mxu0 0.0
      %411 = vmatprep.subr.mxu0 0.0
      %412 = vmatpush1.msra.mxu0 0.0
      %413 = vmatprep.subr.mxu0 0.0
      %414 = vmatpush1.msra.mxu0 0.0
      %415 = vmatprep.subr.mxu0 0.0
      %416 = vmatpush1.msra.mxu0 0.0
      %417 = vmatprep.subr.mxu0 0.0
      %418 = vmatpush1.msra.mxu0 0.0
      %419 = vmatprep.subr.mxu0 0.0
      %420 = vmatpush1.msra.mxu0 0.0
      %421 = vmatprep.subr.mxu0 0.0
      %422 = vmatpush1.msra.mxu0 0.0
      %423 = vmatprep.subr.mxu0 0.0
      %424 = vmatpush1.msra.mxu0 0.0
      %425 = vmatprep.subr.mxu0 0.0
      %426 = vmatpush1.msra.mxu0 0.0
      %427 = vmatprep.subr.mxu0 0.0
      %428 = vmatpush1.msra.mxu0 0.0
      %429 = vmatprep.subr.mxu0 0.0
      %430 = vmatpush1.msra.mxu0 0.0
      %431 = vmatprep.subr.mxu0 0.0
      %432 = vmatpush1.msra.mxu0 0.0
      %433 = vmatprep.subr.mxu0 0.0
      %434 = vmatpush1.msra.mxu0 0.0
      %435 = vmatprep.subr.mxu0 0.0
      %436 = vmatpush1.msra.mxu0 0.0
      %437 = vmatprep.subr.mxu0 0.0
      %438 = vmatpush1.msra.mxu0 0.0
      %439 = vmatprep.subr.mxu0 0.0
      %440 = vmatpush1.msra.mxu0 0.0
      %441 = vmatprep.subr.mxu0 0.0
      %442 = vmatpush1.msra.mxu0 0.0
      %443 = vmatprep.subr.mxu0 0.0
      %444 = vmatpush1.msra.mxu0 0.0
      %445 = vmatprep.subr.mxu0 0.0
      %446 = vmatpush1.msra.mxu0 0.0
      %447 = vmatprep.subr.mxu0 0.0
      %448 = vmatpush1.msra.mxu0 0.0
      %449 = vmatprep.subr.mxu0 0.0
      %450 = vmatpush1.msra.mxu0 0.0
      %451 = vmatprep.subr.mxu0 0.0
      %452 = vmatpush1.msra.mxu0 0.0
      %453 = vmatprep.subr.mxu0 0.0
      %454 = vmatpush1.msra.mxu0 0.0
      %455 = vmatprep.subr.mxu0 0.0
      %456 = vmatpush1.msra.mxu0 0.0
      %457 = vmatprep.subr.mxu0 0.0
      %458 = vmatpush1.msra.mxu0 0.0
      %459 = vmatprep.subr.mxu0 0.0
      %460 = vmatpush1.msra.mxu0 0.0
      %461 = vmatprep.subr.mxu0 0.0
      %462 = vmatpush1.msra.mxu0 0.0
      %463 = vmatprep.mubr.f32.mxu0 0.0
      %464 = vmatmul.mubr.f32.gmra.mrb[0].mxu0 %v397
      %v465 = vpop.f32.mrb[0].mxu0
      %v466 = vadd.f32 0.0, %v465
      %v467 = vpop.f32.mrb[0].mxu0
      %468 = vdwg.mxu0
      %v469 = vmul.f32 %v466, %v395
      %470 = vmatprep.subr.mxu0 0.0
      %471 = vmatpush1.xpose.msra.mxu0 %v270
      %472 = vmatprep.subr.mxu0 0.0
      %473 = vmatpush1.xpose.msra.mxu0 %v275
      %474 = vmatprep.subr.mxu0 0.0
      %475 = vmatpush1.xpose.msra.mxu0 0.0
      %476 = vmatprep.subr.mxu0 0.0
      %477 = vmatpush1.xpose.msra.mxu0 0.0
      %478 = vmatprep.subr.mxu0 0.0
      %479 = vmatpush1.xpose.msra.mxu0 0.0
      %480 = vmatprep.subr.mxu0 0.0
      %481 = vmatpush1.xpose.msra.mxu0 0.0
      %482 = vmatprep.subr.mxu0 0.0
      %483 = vmatpush1.xpose.msra.mxu0 0.0
      %484 = vmatprep.subr.mxu0 0.0
      %485 = vmatpush1.xpose.msra.mxu0 0.0
      %486 = vmatprep.subr.mxu0 0.0
      %487 = vmatpush1.xpose.msra.mxu0 0.0
      %488 = vmatprep.subr.mxu0 0.0
      %489 = vmatpush1.xpose.msra.mxu0 0.0
      %490 = vmatprep.subr.mxu0 0.0
      %491 = vmatpush1.xpose.msra.mxu0 0.0
      %492 = vmatprep.subr.mxu0 0.0
      %493 = vmatpush1.xpose.msra.mxu0 0.0
      %494 = vmatprep.subr.mxu0 0.0
      %495 = vmatpush1.xpose.msra.mxu0 0.0
      %496 = vmatprep.subr.mxu0 0.0
      %497 = vmatpush1.xpose.msra.mxu0 0.0
      %498 = vmatprep.subr.mxu0 0.0
      %499 = vmatpush1.xpose.msra.mxu0 0.0
      %500 = vmatprep.subr.mxu0 0.0
      %501 = vmatpush1.xpose.msra.mxu0 0.0
      %502 = vmatprep.subr.mxu0 0.0
      %503 = vmatpush1.xpose.msra.mxu0 0.0
      %504 = vmatprep.subr.mxu0 0.0
      %505 = vmatpush1.xpose.msra.mxu0 0.0
      %506 = vmatprep.subr.mxu0 0.0
      %507 = vmatpush1.xpose.msra.mxu0 0.0
      %508 = vmatprep.subr.mxu0 0.0
      %509 = vmatpush1.xpose.msra.mxu0 0.0
      %510 = vmatprep.subr.mxu0 0.0
      %511 = vmatpush1.xpose.msra.mxu0 0.0
      %512 = vmatprep.subr.mxu0 0.0
      %513 = vmatpush1.xpose.msra.mxu0 0.0
      %514 = vmatprep.subr.mxu0 0.0
      %515 = vmatpush1.xpose.msra.mxu0 0.0
      %516 = vmatprep.subr.mxu0 0.0
      %517 = vmatpush1.xpose.msra.mxu0 0.0
      %518 = vmatprep.subr.mxu0 0.0
      %519 = vmatpush1.xpose.msra.mxu0 0.0
      %520 = vmatprep.subr.mxu0 0.0
      %521 = vmatpush1.xpose.msra.mxu0 0.0
      %522 = vmatprep.subr.mxu0 0.0
      %523 = vmatpush1.xpose.msra.mxu0 0.0
      %524 = vmatprep.subr.mxu0 0.0
      %525 = vmatpush1.xpose.msra.mxu0 0.0
      %526 = vmatprep.subr.mxu0 0.0
      %527 = vmatpush1.xpose.msra.mxu0 0.0
      %528 = vmatprep.subr.mxu0 0.0
      %529 = vmatpush1.xpose.msra.mxu0 0.0
      %530 = vmatprep.subr.mxu0 0.0
      %531 = vmatpush1.xpose.msra.mxu0 0.0
      %532 = vmatprep.subr.mxu0 0.0
      %533 = vmatpush1.xpose.msra.mxu0 0.0
      %534 = vmatprep.mubr.f32.mxu0 0.0
      %535 = vmatmul.mubr.f32.gmra.mrb[0].mxu0 %v270
      %v536 = vpop.f32.mrb[0].mxu0
      %v537 = vadd.f32 0.0, %v536
      %v538 = vpop.f32.mrb[0].mxu0
      %539 = vmatprep.mubr.f32.mxu0 0.0
      %540 = vmatmul.mubr.f32.gmra.mrb[0].mxu0 %v275
      %v541 = vpop.f32.mrb[0].mxu0
      %v542 = vadd.f32 0.0, %v541
      %v543 = vpop.f32.mrb[0].mxu0
      %544 = vdwg.mxu0
      %v545 = vmul.f32 %v537, 0.25
      %v546 = vmul.f32 %v542, 0.25
      %vm547 = vcmask 130048
      %v548 = vsel %vm547, %v545, -inf
      %549 = vmax.xlane.f32.xlu0 %v548
      %v550 = vpop.xlane.xlu0 %549
      %v551 = vsel %vm547, %v546, -inf
      %552 = vmax.xlane.f32.xlu0 %v551
      %v553 = vpop.xlane.xlu0 %552
      %v554 = vsub.f32 %v545, %v550
      %v555 = vsub.f32 %v546, %v553
      %v556 = vmul.f32 %v554, 1.442695
      %v557 = vpow.pop %v556
      %v558 = vmul.f32 %v555, 1.442695
      %v559 = vpow.pop %v558
      %v560 = vsel %vm547, %v557, 0.0
      %561 = vadd.xlane.f32.xlu0 %v560
      %v562 = vpop.xlane.xlu0 %561
      %v563 = vsel %vm547, %v559, 0.0
      %564 = vadd.xlane.f32.xlu0 %v563
      %v565 = vpop.xlane.xlu0 %564
      %v566 = vrcp.pop %v562
      %v567 = vrcp.pop %v565
      %v569 = vsel %vm547, %v557, 0
      %v572 = vsel %vm547, %v559, 0
      %574 = vmatprep.subr.mxu0 0.0
      %575 = vmatpush1.msra.mxu0 %v312
      %576 = vmatprep.subr.mxu0 0.0
      %577 = vmatpush1.msra.mxu0 %v313
      %578 = vmatprep.subr.mxu0 0.0
      %579 = vmatpush1.msra.mxu0 0.0
      %580 = vmatprep.subr.mxu0 0.0
      %581 = vmatpush1.msra.mxu0 0.0
      %582 = vmatprep.subr.mxu0 0.0
      %583 = vmatpush1.msra.mxu0 0.0
      %584 = vmatprep.subr.mxu0 0.0
      %585 = vmatpush1.msra.mxu0 0.0
      %586 = vmatprep.subr.mxu0 0.0
      %587 = vmatpush1.msra.mxu0 0.0
      %588 = vmatprep.subr.mxu0 0.0
      %589 = vmatpush1.msra.mxu0 0.0
      %590 = vmatprep.subr.mxu0 0.0
      %591 = vmatpush1.msra.mxu0 0.0
      %592 = vmatprep.subr.mxu0 0.0
      %593 = vmatpush1.msra.mxu0 0.0
      %594 = vmatprep.subr.mxu0 0.0
      %595 = vmatpush1.msra.mxu0 0.0
      %596 = vmatprep.subr.mxu0 0.0
      %597 = vmatpush1.msra.mxu0 0.0
      %598 = vmatprep.subr.mxu0 0.0
      %599 = vmatpush1.msra.mxu0 0.0
      %600 = vmatprep.subr.mxu0 0.0
      %601 = vmatpush1.msra.mxu0 0.0
      %602 = vmatprep.subr.mxu0 0.0
      %603 = vmatpush1.msra.mxu0 0.0
      %604 = vmatprep.subr.mxu0 0.0
      %605 = vmatpush1.msra.mxu0 0.0
      %606 = vmatprep.subr.mxu0 0.0
      %607 = vmatpush1.msra.mxu0 0.0
      %608 = vmatprep.subr.mxu0 0.0
      %609 = vmatpush1.msra.mxu0 0.0
      %610 = vmatprep.subr.mxu0 0.0
      %611 = vmatpush1.msra.mxu0 0.0
      %612 = vmatprep.subr.mxu0 0.0
      %613 = vmatpush1.msra.mxu0 0.0
      %614 = vmatprep.subr.mxu0 0.0
      %615 = vmatpush1.msra.mxu0 0.0
      %616 = vmatprep.subr.mxu0 0.0
      %617 = vmatpush1.msra.mxu0 0.0
      %618 = vmatprep.subr.mxu0 0.0
      %619 = vmatpush1.msra.mxu0 0.0
      %620 = vmatprep.subr.mxu0 0.0
      %621 = vmatpush1.msra.mxu0 0.0
      %622 = vmatprep.subr.mxu0 0.0
      %623 = vmatpush1.msra.mxu0 0.0
      %624 = vmatprep.subr.mxu0 0.0
      %625 = vmatpush1.msra.mxu0 0.0
      %626 = vmatprep.subr.mxu0 0.0
      %627 = vmatpush1.msra.mxu0 0.0
      %628 = vmatprep.subr.mxu0 0.0
      %629 = vmatpush1.msra.mxu0 0.0
      %630 = vmatprep.subr.mxu0 0.0
      %631 = vmatpush1.msra.mxu0 0.0
      %632 = vmatprep.subr.mxu0 0.0
      %633 = vmatpush1.msra.mxu0 0.0
      %634 = vmatprep.subr.mxu0 0.0
      %635 = vmatpush1.msra.mxu0 0.0
      %636 = vmatprep.subr.mxu0 0.0
      %637 = vmatpush1.msra.mxu0 0.0
      %638 = vmatprep.mubr.f32.mxu0 0.0
      %639 = vmatmul.mubr.f32.gmra.mrb[0].mxu0 %v569
      %v640 = vpop.f32.mrb[0].mxu0
      %v641 = vadd.f32 0.0, %v640
      %v642 = vpop.f32.mrb[0].mxu0
      %643 = vmatprep.mubr.f32.mxu0 0.0
      %644 = vmatmul.mubr.f32.gmra.mrb[0].mxu0 %v572
      %v645 = vpop.f32.mrb[0].mxu0
      %v646 = vadd.f32 0.0, %v645
      %v647 = vpop.f32.mrb[0].mxu0
      %648 = vdwg.mxu0
      %v649 = vmul.f32 %v641, %v566
      %v650 = vmul.f32 %v646, %v567
      %651 = vst [vmem:[%s167] sm:$0xff] %v469
      %652 = vst [vmem:[%s167 + $0x8] sm:$0xff] %v649
      %653 = vst [vmem:[%s167 + $0x10] sm:$0xff] %v650
      %p654 = scmp.lt.s32.totalorder %s14, 1
      %s655 = scalar_select %p654, %s14, 1
      %s656 = smul.addr %s655, 3
      %s657 = smul.addr %s656, 8
      %s658 = scalar_lea.vmem %s3, %s657
      // Predicated region
      $region33: #{point_diffusion_encoder.1} parent=31 // pred_check
        %p659 = pneg %p100
      $region34: #{point_diffusion_encoder.1} parent=31 // pred_check_branch
        %661 = sbr.rel (%p659) target = $region36
      $region35: #{point_diffusion_encoder.1} parent=31 // pred_region
        _
      $region36: #{point_diffusion_encoder.1} parent=31 // pred_fallthru
        _
    $region32: #{point_diffusion_encoder.1} parent=5 // pred_fallthru
      _
    %p662 = scmp.le.s32.totalorder 2, %s9
    // Predicated region
    $region37: #{point_diffusion_encoder.1} parent=5 // pred_check
      %p663 = pneg %p662
    $region38: #{point_diffusion_encoder.1} parent=5 // pred_check_branch
      %665 = sbr.rel (%p663) target = $region40
    $region39: #{point_diffusion_encoder.1} parent=5 // pred_region
      %s666 = ssub.s32 %s9, 2
      // Predicated region
      $region41: #{point_diffusion_encoder.1} parent=39 // pred_check
        %p667 = pneg %p106
      $region42: #{point_diffusion_encoder.1} parent=39 // pred_check_branch
        %669 = sbr.rel (%p667) target = $region44
      $region43: #{point_diffusion_encoder.1} parent=39 // pred_region
        %p670 = scmp.lt.s32.totalorder %s15, 1
        %s671 = scalar_select %p670, %s15, 1
        %s672 = smul.addr %s671, 3
        %s673 = smul.addr %s672, 8
        %s674 = scalar_lea.vmem %s3, %s673
      $region44: #{point_diffusion_encoder.1} parent=39 // pred_fallthru
        _
    $region40: #{point_diffusion_encoder.1} parent=5 // pred_fallthru
      _
  $region6: #{point_diffusion_encoder.1} parent=0 // loop_footer
    %s13 = sadd.s32 1, %s9
  $region7: #{point_diffusion_encoder.1} parent=0 // loop_footer_branch
    %8 = sbr.rel target = $region3
  $region8: #{point_diffusion_encoder.1} parent=0 // loop_exit
    _

</llo_original>
